<compile_context>
chip_gen: v6e
topology: v6e:2x2x1
jax: 0.10.0
libtpu: 0.0.40
codegen_flags: <defaults>
</compile_context>

<pallas_src>
import functools

import jax
import jax.numpy as jnp
from jax.experimental import pallas as pl
from jax.experimental.pallas import tpu as pltpu


def _gcnnet_kernel(xp_ref, g_ref, wg1_ref, wg2_ref, adj_ref, ctx_ref, *,
                   n_valid, neg_slope):
    """One grid step = one chunk of the batch (the whole batch by default).

    xp_ref  : (Bc, M, D) f32   zero-padded ROI features
    g_ref   : (D, D)     f32   fused affinity operator  W_src^T @ W_trj
    wg*_ref : (D, D)     bf16  GCN transform weights (pre-transposed)
    adj_ref : (Bc, M, M) f32   row-softmaxed, zero-padded adjacency
    ctx_ref : (Bc, N, D) f32   GCN output, valid (non-padded) rows only
    """
    Bc, M, D = xp_ref.shape
    xp = xp_ref[...].astype(jnp.float32)             # (Bc, M, D)
    xp2 = xp.reshape(Bc * M, D)                      # stack rows -> better MXU fill

    # ---- AffinityNet (fused): scores_b = (x_b @ G) @ x_b^T -----------------
    # (x W_src^T)(x W_trj^T)^T == x (W_src^T W_trj) x^T ; G is precomputed in
    # f32 in the wrapper -> half the affinity FLOPs, full-128-column matmul.
    xg = jnp.dot(xp2, g_ref[...],
                 preferred_element_type=jnp.float32).reshape(Bc, M, D)
    scores = jax.lax.dot_general(                    # (Bc, M, M)
        xg, xp, (((2,), (2,)), ((0,), (0,))),
        preferred_element_type=jnp.float32)

    row = jax.lax.broadcasted_iota(jnp.int32, (Bc, M, M), 1)
    col = jax.lax.broadcasted_iota(jnp.int32, (Bc, M, M), 2)
    col_ok = col < n_valid
    valid = (row < n_valid) & col_ok

    # Row-wise softmax over the valid NxN block (F.softmax dim=1 on a 2-D
    # tensor), then zero-pad to max_nodes (F.pad(..., value=0)).  The divide
    # goes to the EUP approximate reciprocal (free slot next to the exp).
    masked = jnp.where(col_ok, scores, -1e30)
    mx = jnp.max(masked, axis=-1, keepdims=True)
    ex = jnp.exp(masked - mx)
    inv = pl.reciprocal(jnp.sum(ex, axis=-1, keepdims=True), approx=True)
    adj = jnp.where(valid, ex * inv, 0.0)            # (Bc, M, M)
    # NOTE: adj's last dim (M=16) is < 128 lanes -> masked stores; negligible
    # here, pad to a multiple of 128 if max_nodes grows in production.
    adj_ref[...] = adj.astype(adj_ref.dtype)

    # ---- GCN: 2 x { X @ W (bf16 in / f32 acc) -> bmm(adj, .) -> leaky_relu }
    h = xp
    for w_ref in (wg1_ref, wg2_ref):
        t = jnp.dot(h.reshape(Bc * M, D).astype(w_ref.dtype), w_ref[...],
                    preferred_element_type=jnp.float32).reshape(Bc, M, D)
        h = jax.lax.dot_general(                     # bmm(adj, t)
            adj, t, (((2,), (1,)), ((0,), (0,))),
            preferred_element_type=jnp.float32)
        h = jnp.where(h >= 0, h, neg_slope * h)      # leaky_relu(0.1)

    # Only the valid rows are written back (lane-dense (N, 128) store).
    ctx_ref[...] = h[:, :n_valid, :].astype(ctx_ref.dtype)


def gcn_net_forward(roi_feat, params, *, max_nodes, num_chunks=1):
    """roi_feat: (B, N, D) f32. Returns (adjacency (B,M,M), roi_feat_context (B*N, D)).

    num_chunks=1 processes the whole batch in a single grid step (best on the
    single-TensorCore v5e/v6e); num_chunks=2 splits the batch across a 2-wide
    "parallel" grid axis so each v7x TensorCore takes half the batch.
    """
    B, N, D = roi_feat.shape
    M = max_nodes
    assert N <= M and B % num_chunks == 0
    Bc = B // num_chunks

    # glue: pad ROI features to max_nodes (mirrors F.pad in the module).
    xp = jnp.pad(roi_feat, ((0, 0), (0, M - N), (0, 0)))

    # Fused affinity operator, precomputed once in f32 (precision-sensitive path).
    g = jnp.dot(params["w_src_t"], params["w_trj_t"].T)         # (D, D)
    # GCN transform weights feed the MXU in bf16 (accumulation stays f32).
    wg1 = params["w_gcn1_t"].astype(jnp.bfloat16)
    wg2 = params["w_gcn2_t"].astype(jnp.bfloat16)

    kernel = functools.partial(_gcnnet_kernel, n_valid=N, neg_slope=0.1)
    adj, ctx = pl.pallas_call(
        kernel,
        out_shape=(jax.ShapeDtypeStruct((B, M, M), jnp.float32),
                   jax.ShapeDtypeStruct((B, N, D), jnp.float32)),
        grid_spec=pltpu.PrefetchScalarGridSpec(
            num_scalar_prefetch=0,
            grid=(num_chunks,),
            in_specs=[
                pl.BlockSpec((Bc, M, D), lambda c: (c, 0, 0)),   # padded roi feats
                pl.BlockSpec((D, D), lambda c: (0, 0)),          # G = Wsrc^T Wtrj (f32)
                pl.BlockSpec((D, D), lambda c: (0, 0)),          # W_gcn1^T (bf16)
                pl.BlockSpec((D, D), lambda c: (0, 0)),          # W_gcn2^T (bf16)
            ],
            out_specs=[
                pl.BlockSpec((Bc, M, M), lambda c: (c, 0, 0)),
                pl.BlockSpec((Bc, N, D), lambda c: (c, 0, 0)),
            ]),
        compiler_params=pltpu.CompilerParams(dimension_semantics=("parallel",)),
    )(xp, g, wg1, wg2)

    # glue: roi_feat_context.view(-1, D)[valid_indices] -> the kernel already
    # dropped the padded rows, so a static reshape replaces the gather.
    roi_feat_context = ctx.reshape(B * N, D)
    return adj, roi_feat_context


def _reference(roi_feat, params, max_nodes):
    """Pure-JAX (f32) mirror of the PyTorch semantics for verification."""
    B, N, D = roi_feat.shape
    M = max_nodes
    src = roi_feat @ params["w_src_t"]
    trj = roi_feat @ params["w_trj_t"]
    scores = jnp.einsum("bnd,bmd->bnm", src, trj)
    prob = jax.nn.softmax(scores, axis=-1)
    adj = jnp.zeros((B, M, M), jnp.float32).at[:, :N, :N].set(prob)
    x = jnp.pad(roi_feat, ((0, 0), (0, M - N), (0, 0)))
    for w in (params["w_gcn1_t"], params["w_gcn2_t"]):
        x = jnp.einsum("bij,bjd->bid", adj, x @ w)
        x = jnp.where(x >= 0, x, 0.1 * x)
    return adj, x[:, :N, :].reshape(B * N, D)


def init_params(key, nz_feat):
    """Deterministic stand-in for the nn.Linear weights (bias=False everywhere).

    Stored pre-transposed as (in_features, out_features)."""
    ks = jax.random.split(key, 4)
    scale = 1.0 / jnp.sqrt(nz_feat)

    def w(k):
        return jax.random.uniform(k, (nz_feat, nz_feat), jnp.float32, -scale, scale)

    return {
        "w_src_t": w(ks[0]),    # AffinityNet.encoder_src  (nz_af == nz_feat)
        "w_trj_t": w(ks[1]),    # AffinityNet.encoder_trj
        "w_gcn1_t": w(ks[2]),   # GCN layer 1 transform_layer
        "w_gcn2_t": w(ks[3]),   # GCN layer 2 transform_layer
    }


if __name__ == "__main__":
    B, N, MAX_NODES, NZ_FEAT = 2, 8, 16, 128

    key = jax.random.PRNGKey(0)
    k_feat, k_param = jax.random.split(key)
    params = init_params(k_param, NZ_FEAT)
    # roi_feat stands in for the output of roi_encoder: N ROIs per batch.
    roi_feat = jax.random.normal(k_feat, (B, N, NZ_FEAT), jnp.float32)

    adj_ref, ctx_ref = _reference(roi_feat, params, MAX_NODES)

    # Single grid step over the whole batch (v5e/v6e configuration).
    adj, ctx = gcn_net_forward(roi_feat, params, max_nodes=MAX_NODES)
    jax.block_until_ready((adj, ctx))
    # Tolerances: adjacency uses the EUP approximate reciprocal + fused-G
    # reassociation; ctx uses bf16 MXU inputs (f32 accumulation).
    assert jnp.allclose(adj, adj_ref, atol=5e-3, rtol=5e-3)
    assert jnp.allclose(ctx, ctx_ref, atol=1e-2, rtol=1e-2)

    # 2-way batch split over a "parallel" grid axis (v7x: one chunk per TC).
    adj2, ctx2 = gcn_net_forward(roi_feat, params, max_nodes=MAX_NODES,
                                 num_chunks=2)
    jax.block_until_ready((adj2, ctx2))
    assert jnp.allclose(adj2, adj_ref, atol=5e-3, rtol=5e-3)
    assert jnp.allclose(ctx2, ctx_ref, atol=1e-2, rtol=1e-2)

    print("KERNEL_OK")
</pallas_src>

<mosaic_0001>
module attributes {stable_mosaic.version = 11 : i64} {
  func.func @_gcnnet_kernel(%arg0: i32, %arg1: memref<2x16x128xf32, #tpu.memory_space<vmem>>, %arg2: memref<128x128xf32, #tpu.memory_space<vmem>>, %arg3: memref<128x128xbf16, #tpu.memory_space<vmem>>, %arg4: memref<128x128xbf16, #tpu.memory_space<vmem>>, %arg5: memref<2x16x16xf32, #tpu.memory_space<vmem>>, %arg6: memref<2x8x128xf32, #tpu.memory_space<vmem>>) attributes {dimension_semantics = [#tpu.dimension_semantics<parallel>], iteration_bounds = array<i64: 1>, scalar_prefetch = 0 : i64, scratch_operands = 0 : i64, tpu.core_type = #tpu.core_type<tc>, window_params = [{transform_indices = @transform_0, window_bounds = array<i64: 2, 16, 128>}, {pipeline_mode = #tpu.pipeline_mode<synchronous>, transform_indices = @transform_1, window_bounds = array<i64: 128, 128>}, {pipeline_mode = #tpu.pipeline_mode<synchronous>, transform_indices = @transform_2, window_bounds = array<i64: 128, 128>}, {pipeline_mode = #tpu.pipeline_mode<synchronous>, transform_indices = @transform_3, window_bounds = array<i64: 128, 128>}, {transform_indices = @transform_4, window_bounds = array<i64: 2, 16, 16>}, {transform_indices = @transform_5, window_bounds = array<i64: 2, 8, 128>}]} {
    %c0 = arith.constant 0 : index
    %c0_0 = arith.constant 0 : index
    %c0_1 = arith.constant 0 : index
    %0 = vector.load %arg1[%c0, %c0_0, %c0_1] : memref<2x16x128xf32, #tpu.memory_space<vmem>>, vector<2x16x128xf32>
    %1 = vector.shape_cast %0 : vector<2x16x128xf32> to vector<32x128xf32>
    %c0_2 = arith.constant 0 : index
    %c0_3 = arith.constant 0 : index
    %2 = vector.load %arg2[%c0_2, %c0_3] : memref<128x128xf32, #tpu.memory_space<vmem>>, vector<128x128xf32>
    %cst = arith.constant dense<0.000000e+00> : vector<32x128xf32>
    %3 = tpu.matmul %1, %2, %cst {dimension_numbers = #tpu.dot_dimension_numbers<[1], [0], [0], [1], [0, 0, 1, 1], [], []>} : vector<32x128xf32>, vector<128x128xf32>, vector<32x128xf32> -> vector<32x128xf32>
    %4 = vector.shape_cast %3 : vector<32x128xf32> to vector<2x16x128xf32>
    %cst_4 = arith.constant dense<0.000000e+00> : vector<2x16x16xf32>
    %5 = tpu.matmul %4, %0, %cst_4 {dimension_numbers = #tpu.dot_dimension_numbers<[2], [2], [1], [1], [0, 0, 0, 1, 1, 1], [0], [0]>} : vector<2x16x128xf32>, vector<2x16x128xf32>, vector<2x16x16xf32> -> vector<2x16x16xf32>
    %6 = tpu.iota {dimensions = array<i32: 1>} : vector<2x16x16xi32>
    %7 = tpu.iota {dimensions = array<i32: 2>} : vector<2x16x16xi32>
    %c8_i32 = arith.constant 8 : i32
    %8 = vector.broadcast %c8_i32 : i32 to vector<2x16x16xi32>
    %9 = arith.cmpi slt, %7, %8 : vector<2x16x16xi32>
    %c8_i32_5 = arith.constant 8 : i32
    %10 = vector.broadcast %c8_i32_5 : i32 to vector<2x16x16xi32>
    %11 = arith.cmpi slt, %6, %10 : vector<2x16x16xi32>
    %12 = arith.andi %11, %9 : vector<2x16x16xi1>
    %cst_6 = arith.constant -1.000000e+30 : f32
    %13 = vector.broadcast %cst_6 : f32 to vector<2x16x16xf32>
    %14 = arith.select %9, %5, %13 : vector<2x16x16xi1>, vector<2x16x16xf32>
    %cst_7 = arith.constant dense<0xFF800000> : vector<2x16xf32>
    %15 = vector.multi_reduction <maximumf>, %14, %cst_7 [2] : vector<2x16x16xf32> to vector<2x16xf32>
    %16 = vector.shape_cast %15 : vector<2x16xf32> to vector<2x16x1xf32>
    %17 = vector.broadcast %16 : vector<2x16x1xf32> to vector<2x16x16xf32>
    %18 = arith.subf %14, %17 : vector<2x16x16xf32>
    %19 = math.exp %18 : vector<2x16x16xf32>
    %cst_8 = arith.constant dense<0.000000e+00> : vector<2x16xf32>
    %20 = vector.multi_reduction <add>, %19, %cst_8 [2] : vector<2x16x16xf32> to vector<2x16xf32>
    %21 = vector.shape_cast %20 : vector<2x16xf32> to vector<2x16x1xf32>
    %22 = tpu.reciprocal %21 {approx = true} : vector<2x16x1xf32> -> vector<2x16x1xf32>
    %23 = vector.broadcast %22 : vector<2x16x1xf32> to vector<2x16x16xf32>
    %24 = arith.mulf %19, %23 : vector<2x16x16xf32>
    %cst_9 = arith.constant 0.000000e+00 : f32
    %25 = vector.broadcast %cst_9 : f32 to vector<2x16x16xf32>
    %26 = arith.select %12, %24, %25 : vector<2x16x16xi1>, vector<2x16x16xf32>
    %c0_10 = arith.constant 0 : index
    %c0_11 = arith.constant 0 : index
    %c0_12 = arith.constant 0 : index
    %27 = vector.load %arg5[%c0_10, %c0_11, %c0_12] : memref<2x16x16xf32, #tpu.memory_space<vmem>>, vector<2x16x16xf32>
    tpu.vector_store %arg5[%c0_10, %c0_11, %c0_12], %26 {strides = array<i32>} : memref<2x16x16xf32, #tpu.memory_space<vmem>>, vector<2x16x16xf32>,
    %28 = vector.shape_cast %0 : vector<2x16x128xf32> to vector<32x128xf32>
    %29 = arith.truncf %28 : vector<32x128xf32> to vector<32x128xbf16>
    %c0_13 = arith.constant 0 : index
    %c0_14 = arith.constant 0 : index
    %30 = vector.load %arg3[%c0_13, %c0_14] : memref<128x128xbf16, #tpu.memory_space<vmem>>, vector<128x128xbf16>
    %cst_15 = arith.constant dense<0.000000e+00> : vector<32x128xf32>
    %31 = tpu.matmul %29, %30, %cst_15 {dimension_numbers = #tpu.dot_dimension_numbers<[1], [0], [0], [1], [0, 0, 1, 1], [], []>} : vector<32x128xbf16>, vector<128x128xbf16>, vector<32x128xf32> -> vector<32x128xf32>
    %32 = vector.shape_cast %31 : vector<32x128xf32> to vector<2x16x128xf32>
    %cst_16 = arith.constant dense<0.000000e+00> : vector<2x16x128xf32>
    %33 = tpu.matmul %26, %32, %cst_16 {dimension_numbers = #tpu.dot_dimension_numbers<[2], [1], [1], [2], [0, 0, 0, 1, 1, 2], [0], [0]>} : vector<2x16x16xf32>, vector<2x16x128xf32>, vector<2x16x128xf32> -> vector<2x16x128xf32>
    %cst_17 = arith.constant 0.000000e+00 : f32
    %34 = vector.broadcast %cst_17 : f32 to vector<2x16x128xf32>
    %35 = arith.cmpf oge, %33, %34 : vector<2x16x128xf32>
    %cst_18 = arith.constant 1.000000e-01 : f32
    %36 = vector.broadcast %cst_18 : f32 to vector<2x16x128xf32>
    %37 = arith.mulf %36, %33 : vector<2x16x128xf32>
    %38 = arith.select %35, %33, %37 : vector<2x16x128xi1>, vector<2x16x128xf32>
    %39 = vector.shape_cast %38 : vector<2x16x128xf32> to vector<32x128xf32>
    %40 = arith.truncf %39 : vector<32x128xf32> to vector<32x128xbf16>
    %c0_19 = arith.constant 0 : index
    %c0_20 = arith.constant 0 : index
    %41 = vector.load %arg4[%c0_19, %c0_20] : memref<128x128xbf16, #tpu.memory_space<vmem>>, vector<128x128xbf16>
    %cst_21 = arith.constant dense<0.000000e+00> : vector<32x128xf32>
    %42 = tpu.matmul %40, %41, %cst_21 {dimension_numbers = #tpu.dot_dimension_numbers<[1], [0], [0], [1], [0, 0, 1, 1], [], []>} : vector<32x128xbf16>, vector<128x128xbf16>, vector<32x128xf32> -> vector<32x128xf32>
    %43 = vector.shape_cast %42 : vector<32x128xf32> to vector<2x16x128xf32>
    %cst_22 = arith.constant dense<0.000000e+00> : vector<2x16x128xf32>
    %44 = tpu.matmul %26, %43, %cst_22 {dimension_numbers = #tpu.dot_dimension_numbers<[2], [1], [1], [2], [0, 0, 0, 1, 1, 2], [0], [0]>} : vector<2x16x16xf32>, vector<2x16x128xf32>, vector<2x16x128xf32> -> vector<2x16x128xf32>
    %cst_23 = arith.constant 0.000000e+00 : f32
    %45 = vector.broadcast %cst_23 : f32 to vector<2x16x128xf32>
    %46 = arith.cmpf oge, %44, %45 : vector<2x16x128xf32>
    %cst_24 = arith.constant 1.000000e-01 : f32
    %47 = vector.broadcast %cst_24 : f32 to vector<2x16x128xf32>
    %48 = arith.mulf %47, %44 : vector<2x16x128xf32>
    %49 = arith.select %46, %44, %48 : vector<2x16x128xi1>, vector<2x16x128xf32>
    %50 = vector.extract_strided_slice %49 {offsets = [0, 0, 0], sizes = [2, 8, 128], strides = [1, 1, 1]} : vector<2x16x128xf32> to vector<2x8x128xf32>
    %c0_25 = arith.constant 0 : index
    %c0_26 = arith.constant 0 : index
    %c0_27 = arith.constant 0 : index
    %51 = vector.load %arg6[%c0_25, %c0_26, %c0_27] : memref<2x8x128xf32, #tpu.memory_space<vmem>>, vector<2x8x128xf32>
    tpu.vector_store %arg6[%c0_25, %c0_26, %c0_27], %50 {strides = array<i32>} : memref<2x8x128xf32, #tpu.memory_space<vmem>>, vector<2x8x128xf32>,
    return
  }
  func.func @transform_0(%arg0: i32) -> (i32, i32, i32) {
    %c0_i32 = arith.constant 0 : i32
    %c0_i32_0 = arith.constant 0 : i32
    %c0_i32_1 = arith.constant 0 : i32
    return %arg0, %c0_i32, %c0_i32_0 : i32, i32, i32
  }
  func.func @transform_1(%arg0: i32) -> (i32, i32) {
    %c0_i32 = arith.constant 0 : i32
    %c0_i32_0 = arith.constant 0 : i32
    %c0_i32_1 = arith.constant 0 : i32
    return %c0_i32, %c0_i32_0 : i32, i32
  }
  func.func @transform_2(%arg0: i32) -> (i32, i32) {
    %c0_i32 = arith.constant 0 : i32
    %c0_i32_0 = arith.constant 0 : i32
    %c0_i32_1 = arith.constant 0 : i32
    return %c0_i32, %c0_i32_0 : i32, i32
  }
  func.func @transform_3(%arg0: i32) -> (i32, i32) {
    %c0_i32 = arith.constant 0 : i32
    %c0_i32_0 = arith.constant 0 : i32
    %c0_i32_1 = arith.constant 0 : i32
    return %c0_i32, %c0_i32_0 : i32, i32
  }
  func.func @transform_4(%arg0: i32) -> (i32, i32, i32) {
    %c0_i32 = arith.constant 0 : i32
    %c0_i32_0 = arith.constant 0 : i32
    %c0_i32_1 = arith.constant 0 : i32
    return %arg0, %c0_i32, %c0_i32_0 : i32, i32, i32
  }
  func.func @transform_5(%arg0: i32) -> (i32, i32, i32) {
    %c0_i32 = arith.constant 0 : i32
    %c0_i32_0 = arith.constant 0 : i32
    %c0_i32_1 = arith.constant 0 : i32
    return %arg0, %c0_i32, %c0_i32_0 : i32, i32, i32
  }
}

</mosaic_0001>

<llo_original>
// kernel: tpu_custom_call.1
$region0: #{tpu_custom_call.1}
  #allocation0 [shape = 'u32[]', space=smem, size = 0x4, offset = 0x4, fixed_abs, tag = 'smem constant byte address 0x4 - core index']
  #allocation1 [shape = 'u32[144,128]{1,0:T(1,128)}', space=vmem, size = 0x12000, scoped, tag = 'internal scratch']
  %s0 = inlined_call_operand.hbm [shape: f32[2,16,128], index: 0, kind: input, shape index: {}]
  %s1 = inlined_call_operand.hbm [shape: f32[128,128], index: 1, kind: input, shape index: {}]
  %s2 = inlined_call_operand.hbm [shape: bf16[128,128], index: 2, kind: input, shape index: {}]
  %s3 = inlined_call_operand.hbm [shape: bf16[128,128], index: 3, kind: input, shape index: {}]
  %s4 = inlined_call_operand.hbm [shape: f32[2,16,16], index: 4, kind: output, shape index: {0}]
  %s5 = inlined_call_operand.hbm [shape: f32[2,8,128], index: 5, kind: output, shape index: {1}]
  %6 = xla_tuple %s4, %s5
  %s7 = sld [smem:[#allocation0]]
  $region50: #{tpu_custom_call.1} parent=0
    _
  %s9 = ssub.s32 1, %s7
  %s10 = scalar_select 0, %s9, %s7
  $region1: #{tpu_custom_call.1} parent=0
    #allocation2 [shape = 'u8[16384]{0}', space=vmem, size = 0x4000, scoped, tag = 'input window, operand 0, single buffered']
    #allocation3 [shape = 's32[1]{0}', space=sflag, size = 0x4, scoped, tag = 'scoped memory for tpu_custom_call.1']
    #allocation4 [shape = 's32[1]{0}', space=sflag, size = 0x4, scoped, tag = 'scoped memory for tpu_custom_call.1']
    #allocation5 [shape = 'u8[65536]{0}', space=vmem, size = 0x10000, scoped, tag = 'input window, operand 1, single buffered']
    #allocation6 [shape = 's32[1]{0}', space=sflag, size = 0x4, scoped, tag = 'scoped memory for tpu_custom_call.1']
    #allocation7 [shape = 'u8[32768]{0}', space=vmem, size = 0x8000, scoped, tag = 'input window, operand 2, single buffered']
    #allocation8 [shape = 'u8[32768]{0}', space=vmem, size = 0x8000, scoped, tag = 'input window, operand 3, single buffered']
    #allocation9 [shape = 's32[1]{0}', space=sflag, size = 0x4, scoped, tag = 'scoped memory for tpu_custom_call.1']
    #allocation10 [shape = 'u8[16384]{0}', space=vmem, size = 0x4000, scoped, tag = 'output window, operand 0, single buffered']
    #allocation11 [shape = 'u8[8192]{0}', space=vmem, size = 0x2000, scoped, tag = 'output window, operand 1, single buffered']
    #allocation12 [shape = 's32[1]{0}', space=sflag, size = 0x4, scoped, tag = 'scoped memory for tpu_custom_call.1']
    %11 = vsyncpa [#allocation3], 0
    %12 = vsyncpa [#allocation6], 0
    %13 = vsyncpa [#allocation9], 0
    %14 = vsyncpa [#allocation4], 0
    %15 = vsyncpa [#allocation12], 0
    // Predicated region
    $region2: #{tpu_custom_call.1} parent=1 // pred_check
      _
    $region3: #{tpu_custom_call.1} parent=1 // pred_check_branch
      %17 = sbr.rel (0) target = $region5
    $region4: #{tpu_custom_call.1} parent=1 // pred_region
      %s19 = ssub.s32 512, 512
      %20 = vsyncadd [#allocation3], %s19
      %s21 = sshll.u32 [#allocation2], 4
      %s22 = int_to_ptr.vmem [resolvable:$true] %s21
      %27 = dma.hbm_to_vmem [thread:$0]  %s0, 512, %s22, [#allocation3], 128, 128, 8
    $region5: #{tpu_custom_call.1} parent=1 // pred_fallthru
      _
    // Predicated region
    $region6: #{tpu_custom_call.1} parent=1 // pred_check
      _
    $region7: #{tpu_custom_call.1} parent=1 // pred_check_branch
      %29 = sbr.rel (0) target = $region9
    $region8: #{tpu_custom_call.1} parent=1 // pred_region
      %s31 = ssub.s32 2048, 2048
      %32 = vsyncadd [#allocation6], %s31
      %s33 = sshll.u32 [#allocation5], 4
      %s34 = int_to_ptr.vmem [resolvable:$true] %s33
      %39 = dma.hbm_to_vmem [thread:$0]  %s1, 2048, %s34, [#allocation6], 128, 128, 8
    $region9: #{tpu_custom_call.1} parent=1 // pred_fallthru
      _
    // Predicated region
    $region10: #{tpu_custom_call.1} parent=1 // pred_check
      _
    $region11: #{tpu_custom_call.1} parent=1 // pred_check_branch
      %41 = sbr.rel (0) target = $region13
    $region12: #{tpu_custom_call.1} parent=1 // pred_region
      %s43 = ssub.s32 1024, 1024
      %44 = vsyncadd [#allocation6], %s43
      %s45 = sshll.u32 [#allocation7], 4
      %s46 = int_to_ptr.vmem [resolvable:$true] %s45
      %51 = dma.hbm_to_vmem [thread:$0]  %s2, 1024, %s46, [#allocation6], 64, 64, 4
    $region13: #{tpu_custom_call.1} parent=1 // pred_fallthru
      _
    // Predicated region
    $region14: #{tpu_custom_call.1} parent=1 // pred_check
      _
    $region15: #{tpu_custom_call.1} parent=1 // pred_check_branch
      %53 = sbr.rel (0) target = $region17
    $region16: #{tpu_custom_call.1} parent=1 // pred_region
      %s55 = ssub.s32 1024, 1024
      %56 = vsyncadd [#allocation9], %s55
      %s57 = sshll.u32 [#allocation8], 4
      %s58 = int_to_ptr.vmem [resolvable:$true] %s57
      %63 = dma.hbm_to_vmem [thread:$0]  %s3, 1024, %s58, [#allocation9], 64, 64, 4
    $region17: #{tpu_custom_call.1} parent=1 // pred_fallthru
      _
    // Predicated region
    $region18: #{tpu_custom_call.1} parent=1 // pred_check
      _
    $region19: #{tpu_custom_call.1} parent=1 // pred_check_branch
      %65 = sbr.rel (0) target = $region21
    $region20: #{tpu_custom_call.1} parent=1 // pred_region
      %66 = dma.done [#allocation3], 512
    $region21: #{tpu_custom_call.1} parent=1 // pred_fallthru
      _
    // Predicated region
    $region22: #{tpu_custom_call.1} parent=1 // pred_check
      _
    $region23: #{tpu_custom_call.1} parent=1 // pred_check_branch
      %68 = sbr.rel (0) target = $region25
    $region24: #{tpu_custom_call.1} parent=1 // pred_region
      %69 = dma.done [#allocation6], 2048
    $region25: #{tpu_custom_call.1} parent=1 // pred_fallthru
      _
    // Predicated region
    $region26: #{tpu_custom_call.1} parent=1 // pred_check
      _
    $region27: #{tpu_custom_call.1} parent=1 // pred_check_branch
      %71 = sbr.rel (0) target = $region29
    $region28: #{tpu_custom_call.1} parent=1 // pred_region
      %72 = dma.done [#allocation6], 1024
    $region29: #{tpu_custom_call.1} parent=1 // pred_fallthru
      _
    // Predicated region
    $region30: #{tpu_custom_call.1} parent=1 // pred_check
      _
    $region31: #{tpu_custom_call.1} parent=1 // pred_check_branch
      %74 = sbr.rel (0) target = $region33
    $region32: #{tpu_custom_call.1} parent=1 // pred_region
      %75 = dma.done [#allocation9], 1024
    $region33: #{tpu_custom_call.1} parent=1 // pred_fallthru
      _
    %v77 = vld [vmem:[#allocation2] sm:$0xff]
    %v78 = vld [vmem:[#allocation2 + $0x8] sm:$0xff]
    %v79 = vld [vmem:[#allocation2 + $0x10] sm:$0xff]
    %v80 = vld [vmem:[#allocation2 + $0x18] sm:$0xff]
    %v81 = vld [vmem:[#allocation5] sm:$0xff]
    %v82 = vld [vmem:[#allocation5 + $0x8] sm:$0xff]
    %v83 = vld [vmem:[#allocation5 + $0x10] sm:$0xff]
    %v84 = vld [vmem:[#allocation5 + $0x18] sm:$0xff]
    %v85 = vld [vmem:[#allocation5 + $0x20] sm:$0xff]
    %v86 = vld [vmem:[#allocation5 + $0x28] sm:$0xff]
    %v87 = vld [vmem:[#allocation5 + $0x30] sm:$0xff]
    %v88 = vld [vmem:[#allocation5 + $0x38] sm:$0xff]
    %v89 = vld [vmem:[#allocation5 + $0x40] sm:$0xff]
    %v90 = vld [vmem:[#allocation5 + $0x48] sm:$0xff]
    %v91 = vld [vmem:[#allocation5 + $0x50] sm:$0xff]
    %v92 = vld [vmem:[#allocation5 + $0x58] sm:$0xff]
    %v93 = vld [vmem:[#allocation5 + $0x60] sm:$0xff]
    %v94 = vld [vmem:[#allocation5 + $0x68] sm:$0xff]
    %v95 = vld [vmem:[#allocation5 + $0x70] sm:$0xff]
    %v96 = vld [vmem:[#allocation5 + $0x78] sm:$0xff]
    %97 = vmatprep.subr.mxu0 0.0
    %98 = vmatpush1.msra.mxu0 %v96
    %99 = vmatprep.subr.mxu0 0.0
    %100 = vmatpush1.msra.mxu0 %v95
    %101 = vmatprep.subr.mxu0 0.0
    %102 = vmatpush1.msra.mxu0 %v94
    %103 = vmatprep.subr.mxu0 0.0
    %104 = vmatpush1.msra.mxu0 %v93
    %105 = vmatprep.subr.mxu0 0.0
    %106 = vmatpush1.msra.mxu0 %v92
    %107 = vmatprep.subr.mxu0 0.0
    %108 = vmatpush1.msra.mxu0 %v91
    %109 = vmatprep.subr.mxu0 0.0
    %110 = vmatpush1.msra.mxu0 %v90
    %111 = vmatprep.subr.mxu0 0.0
    %112 = vmatpush1.msra.mxu0 %v89
    %113 = vmatprep.subr.mxu0 0.0
    %114 = vmatpush1.msra.mxu0 %v88
    %115 = vmatprep.subr.mxu0 0.0
    %116 = vmatpush1.msra.mxu0 %v87
    %117 = vmatprep.subr.mxu0 0.0
    %118 = vmatpush1.msra.mxu0 %v86
    %119 = vmatprep.subr.mxu0 0.0
    %120 = vmatpush1.msra.mxu0 %v85
    %121 = vmatprep.subr.mxu0 0.0
    %122 = vmatpush1.msra.mxu0 %v84
    %123 = vmatprep.subr.mxu0 0.0
    %124 = vmatpush1.msra.mxu0 %v83
    %125 = vmatprep.subr.mxu0 0.0
    %126 = vmatpush1.msra.mxu0 %v82
    %127 = vmatprep.subr.mxu0 0.0
    %128 = vmatpush1.msra.mxu0 %v81
    %129 = vmatprep.subr.mxu0 0.0
    %130 = vmatpush2.msra.mxu0 0.0
    %131 = vmatprep.subr.mxu0 0.0
    %132 = vmatpush2.msra.mxu0 0.0
    %133 = vmatprep.subr.mxu0 0.0
    %134 = vmatpush2.msra.mxu0 0.0
    %135 = vmatprep.subr.mxu0 0.0
    %136 = vmatpush2.msra.mxu0 0.0
    %137 = vmatprep.subr.mxu0 0.0
    %138 = vmatpush2.msra.mxu0 0.0
    %139 = vmatprep.subr.mxu0 0.0
    %140 = vmatpush2.msra.mxu0 0.0
    %141 = vmatprep.subr.mxu0 0.0
    %142 = vmatpush2.msra.mxu0 0.0
    %143 = vmatprep.subr.mxu0 0.0
    %144 = vmatpush2.msra.mxu0 0.0
    %145 = vmatprep.subr.mxu0 0.0
    %146 = vmatpush2.msra.mxu0 0.0
    %147 = vmatprep.subr.mxu0 0.0
    %148 = vmatpush2.msra.mxu0 0.0
    %149 = vmatprep.subr.mxu0 0.0
    %150 = vmatpush2.msra.mxu0 0.0
    %151 = vmatprep.subr.mxu0 0.0
    %152 = vmatpush2.msra.mxu0 0.0
    %153 = vmatprep.subr.mxu0 0.0
    %154 = vmatpush2.msra.mxu0 0.0
    %155 = vmatprep.subr.mxu0 0.0
    %156 = vmatpush2.msra.mxu0 0.0
    %157 = vmatprep.subr.mxu0 0.0
    %158 = vmatpush2.msra.mxu0 0.0
    %159 = vmatprep.subr.mxu0 0.0
    %160 = vmatpush2.msra.mxu0 0.0
    %161 = vmatprep.mubr.f32.mxu0 0.0
    %162 = vmatmul.mubr.f32.gmra.mxu0 %v77
    %v163 = vpop.f32.mrf.mxu0
    %v164 = vadd.f32 0.0, %v163
    %v165 = vpop.f32.mrf.mxu0
    %166 = vmatprep.mubr.f32.mxu0 0.0
    %167 = vmatmul.mubr.f32.gmra.mxu0 %v78
    %v168 = vpop.f32.mrf.mxu0
    %v169 = vadd.f32 0.0, %v168
    %v170 = vpop.f32.mrf.mxu0
    %171 = vmatprep.mubr.f32.mxu0 0.0
    %172 = vmatmul.mubr.f32.gmra.mxu0 %v79
    %v173 = vpop.f32.mrf.mxu0
    %v174 = vadd.f32 0.0, %v173
    %v175 = vpop.f32.mrf.mxu0
    %176 = vmatprep.mubr.f32.mxu0 0.0
    %177 = vmatmul.mubr.f32.gmra.mxu0 %v80
    %v178 = vpop.f32.mrf.mxu0
    %v179 = vadd.f32 0.0, %v178
    %v180 = vpop.f32.mrf.mxu0
    %181 = vdwg.mxu0
    %182 = vmatprep.subr.mxu0 0.0
    %183 = vmatpush1.xpose.msra.mxu0 0.0
    %184 = vmatprep.subr.mxu0 0.0
    %185 = vmatpush1.xpose.msra.mxu0 0.0
    %186 = vmatprep.subr.mxu0 0.0
    %187 = vmatpush1.xpose.msra.mxu0 0.0
    %188 = vmatprep.subr.mxu0 0.0
    %189 = vmatpush1.xpose.msra.mxu0 0.0
    %190 = vmatprep.subr.mxu0 0.0
    %191 = vmatpush1.xpose.msra.mxu0 0.0
    %192 = vmatprep.subr.mxu0 0.0
    %193 = vmatpush1.xpose.msra.mxu0 0.0
    %194 = vmatprep.subr.mxu0 0.0
    %195 = vmatpush1.xpose.msra.mxu0 0.0
    %196 = vmatprep.subr.mxu0 0.0
    %197 = vmatpush1.xpose.msra.mxu0 0.0
    %198 = vmatprep.subr.mxu0 0.0
    %199 = vmatpush1.xpose.msra.mxu0 0.0
    %200 = vmatprep.subr.mxu0 0.0
    %201 = vmatpush1.xpose.msra.mxu0 0.0
    %202 = vmatprep.subr.mxu0 0.0
    %203 = vmatpush1.xpose.msra.mxu0 0.0
    %204 = vmatprep.subr.mxu0 0.0
    %205 = vmatpush1.xpose.msra.mxu0 0.0
    %206 = vmatprep.subr.mxu0 0.0
    %207 = vmatpush1.xpose.msra.mxu0 0.0
    %208 = vmatprep.subr.mxu0 0.0
    %209 = vmatpush1.xpose.msra.mxu0 0.0
    %210 = vmatprep.subr.mxu0 0.0
    %211 = vmatpush1.xpose.msra.mxu0 %v78
    %212 = vmatprep.subr.mxu0 0.0
    %213 = vmatpush1.xpose.msra.mxu0 %v77
    %214 = vmatprep.subr.mxu0 0.0
    %215 = vmatpush2.xpose.msra.mxu0 0.0
    %216 = vmatprep.subr.mxu0 0.0
    %217 = vmatpush2.xpose.msra.mxu0 0.0
    %218 = vmatprep.subr.mxu0 0.0
    %219 = vmatpush2.xpose.msra.mxu0 0.0
    %220 = vmatprep.subr.mxu0 0.0
    %221 = vmatpush2.xpose.msra.mxu0 0.0
    %222 = vmatprep.subr.mxu0 0.0
    %223 = vmatpush2.xpose.msra.mxu0 0.0
    %224 = vmatprep.subr.mxu0 0.0
    %225 = vmatpush2.xpose.msra.mxu0 0.0
    %226 = vmatprep.subr.mxu0 0.0
    %227 = vmatpush2.xpose.msra.mxu0 0.0
    %228 = vmatprep.subr.mxu0 0.0
    %229 = vmatpush2.xpose.msra.mxu0 0.0
    %230 = vmatprep.subr.mxu0 0.0
    %231 = vmatpush2.xpose.msra.mxu0 0.0
    %232 = vmatprep.subr.mxu0 0.0
    %233 = vmatpush2.xpose.msra.mxu0 0.0
    %234 = vmatprep.subr.mxu0 0.0
    %235 = vmatpush2.xpose.msra.mxu0 0.0
    %236 = vmatprep.subr.mxu0 0.0
    %237 = vmatpush2.xpose.msra.mxu0 0.0
    %238 = vmatprep.subr.mxu0 0.0
    %239 = vmatpush2.xpose.msra.mxu0 0.0
    %240 = vmatprep.subr.mxu0 0.0
    %241 = vmatpush2.xpose.msra.mxu0 0.0
    %242 = vmatprep.subr.mxu0 0.0
    %243 = vmatpush2.xpose.msra.mxu0 0.0
    %244 = vmatprep.subr.mxu0 0.0
    %245 = vmatpush2.xpose.msra.mxu0 0.0
    %246 = vmatprep.mubr.f32.mxu0 0.0
    %247 = vmatmul.mubr.f32.gmra.mxu0 %v164
    %v248 = vpop.f32.mrf.mxu0
    %v249 = vadd.f32 0.0, %v248
    %v250 = vpop.f32.mrf.mxu0
    %251 = vmatprep.mubr.f32.mxu0 0.0
    %252 = vmatmul.mubr.f32.gmra.mxu0 %v169
    %v253 = vpop.f32.mrf.mxu0
    %v254 = vadd.f32 0.0, %v253
    %v255 = vpop.f32.mrf.mxu0
    %256 = vdwg.mxu0
    %257 = vmatprep.subr.mxu0 0.0
    %258 = vmatpush1.xpose.msra.mxu0 0.0
    %259 = vmatprep.subr.mxu0 0.0
    %260 = vmatpush1.xpose.msra.mxu0 0.0
    %261 = vmatprep.subr.mxu0 0.0
    %262 = vmatpush1.xpose.msra.mxu0 0.0
    %263 = vmatprep.subr.mxu0 0.0
    %264 = vmatpush1.xpose.msra.mxu0 0.0
    %265 = vmatprep.subr.mxu0 0.0
    %266 = vmatpush1.xpose.msra.mxu0 0.0
    %267 = vmatprep.subr.mxu0 0.0
    %268 = vmatpush1.xpose.msra.mxu0 0.0
    %269 = vmatprep.subr.mxu0 0.0
    %270 = vmatpush1.xpose.msra.mxu0 0.0
    %271 = vmatprep.subr.mxu0 0.0
    %272 = vmatpush1.xpose.msra.mxu0 0.0
    %273 = vmatprep.subr.mxu0 0.0
    %274 = vmatpush1.xpose.msra.mxu0 0.0
    %275 = vmatprep.subr.mxu0 0.0
    %276 = vmatpush1.xpose.msra.mxu0 0.0
    %277 = vmatprep.subr.mxu0 0.0
    %278 = vmatpush1.xpose.msra.mxu0 0.0
    %279 = vmatprep.subr.mxu0 0.0
    %280 = vmatpush1.xpose.msra.mxu0 0.0
    %281 = vmatprep.subr.mxu0 0.0
    %282 = vmatpush1.xpose.msra.mxu0 0.0
    %283 = vmatprep.subr.mxu0 0.0
    %284 = vmatpush1.xpose.msra.mxu0 0.0
    %285 = vmatprep.subr.mxu0 0.0
    %286 = vmatpush1.xpose.msra.mxu0 %v80
    %287 = vmatprep.subr.mxu0 0.0
    %288 = vmatpush1.xpose.msra.mxu0 %v79
    %289 = vmatprep.subr.mxu0 0.0
    %290 = vmatpush2.xpose.msra.mxu0 0.0
    %291 = vmatprep.subr.mxu0 0.0
    %292 = vmatpush2.xpose.msra.mxu0 0.0
    %293 = vmatprep.subr.mxu0 0.0
    %294 = vmatpush2.xpose.msra.mxu0 0.0
    %295 = vmatprep.subr.mxu0 0.0
    %296 = vmatpush2.xpose.msra.mxu0 0.0
    %297 = vmatprep.subr.mxu0 0.0
    %298 = vmatpush2.xpose.msra.mxu0 0.0
    %299 = vmatprep.subr.mxu0 0.0
    %300 = vmatpush2.xpose.msra.mxu0 0.0
    %301 = vmatprep.subr.mxu0 0.0
    %302 = vmatpush2.xpose.msra.mxu0 0.0
    %303 = vmatprep.subr.mxu0 0.0
    %304 = vmatpush2.xpose.msra.mxu0 0.0
    %305 = vmatprep.subr.mxu0 0.0
    %306 = vmatpush2.xpose.msra.mxu0 0.0
    %307 = vmatprep.subr.mxu0 0.0
    %308 = vmatpush2.xpose.msra.mxu0 0.0
    %309 = vmatprep.subr.mxu0 0.0
    %310 = vmatpush2.xpose.msra.mxu0 0.0
    %311 = vmatprep.subr.mxu0 0.0
    %312 = vmatpush2.xpose.msra.mxu0 0.0
    %313 = vmatprep.subr.mxu0 0.0
    %314 = vmatpush2.xpose.msra.mxu0 0.0
    %315 = vmatprep.subr.mxu0 0.0
    %316 = vmatpush2.xpose.msra.mxu0 0.0
    %317 = vmatprep.subr.mxu0 0.0
    %318 = vmatpush2.xpose.msra.mxu0 0.0
    %319 = vmatprep.subr.mxu0 0.0
    %320 = vmatpush2.xpose.msra.mxu0 0.0
    %321 = vmatprep.mubr.f32.mxu0 0.0
    %322 = vmatmul.mubr.f32.gmra.mxu0 %v174
    %v323 = vpop.f32.mrf.mxu0
    %v324 = vadd.f32 0.0, %v323
    %v325 = vpop.f32.mrf.mxu0
    %326 = vmatprep.mubr.f32.mxu0 0.0
    %327 = vmatmul.mubr.f32.gmra.mxu0 %v179
    %v328 = vpop.f32.mrf.mxu0
    %v329 = vadd.f32 0.0, %v328
    %v330 = vpop.f32.mrf.mxu0
    %331 = vdwg.mxu0
    %v332 = vlaneseq
    %v333 = vshrl.u32 %v332, 7
    %v334 = vadd.s32 %v333, 8
    %v335 = vlaneseq
    %v336 = vand.u32 %v335, 127
    %vm337 = vcmp.lt.s32.totalorder %v336, 8
    %vm338 = vcmp.lt.s32.totalorder %v333, 8
    %vm339 = vcmp.lt.s32.totalorder %v334, 8
    %vm340 = vmand %vm338, %vm337
    %vm341 = vmand %vm339, %vm337
    %v342 = vsel %vm337, %v249, -1e+30
    %v343 = vsel %vm337, %v254, -1e+30
    %v344 = vsel %vm337, %v324, -1e+30
    %v345 = vsel %vm337, %v329, -1e+30
    %vm346 = vcmask 130048
    %v347 = vsel %vm346, %v342, -inf
    %348 = vmax.xlane.f32.xlu0 %v347
    %v349 = vpop.xlane.xlu0 %348
    %v350 = vsel %vm346, %v343, -inf
    %351 = vmax.xlane.f32.xlu0 %v350
    %v352 = vpop.xlane.xlu0 %351
    %v353 = vsel %vm346, %v344, -inf
    %354 = vmax.xlane.f32.xlu0 %v353
    %v355 = vpop.xlane.xlu0 %354
    %v356 = vsel %vm346, %v345, -inf
    %357 = vmax.xlane.f32.xlu0 %v356
    %v358 = vpop.xlane.xlu0 %357
    %v359 = vsub.f32 %v342, %v349
    %v360 = vsub.f32 %v343, %v352
    %v361 = vsub.f32 %v344, %v355
    %v362 = vsub.f32 %v345, %v358
    %v363 = vmul.f32 %v359, 1.442695
    %v364 = vpow.pop %v363
    %v365 = vmul.f32 %v360, 1.442695
    %v366 = vpow.pop %v365
    %v367 = vmul.f32 %v361, 1.442695
    %v368 = vpow.pop %v367
    %v369 = vmul.f32 %v362, 1.442695
    %v370 = vpow.pop %v369
    %v371 = vsel %vm346, %v364, 0.0
    %372 = vadd.xlane.f32.xlu0 %v371
    %v373 = vpop.xlane.xlu0 %372
    %v374 = vsel %vm346, %v366, 0.0
    %375 = vadd.xlane.f32.xlu0 %v374
    %v376 = vpop.xlane.xlu0 %375
    %v377 = vsel %vm346, %v368, 0.0
    %378 = vadd.xlane.f32.xlu0 %v377
    %v379 = vpop.xlane.xlu0 %378
    %v380 = vsel %vm346, %v370, 0.0
    %381 = vadd.xlane.f32.xlu0 %v380
    %v382 = vpop.xlane.xlu0 %381
    %v383 = vrcp.pop %v373
    %v384 = vrcp.pop %v376
    %v385 = vrcp.pop %v379
    %v386 = vrcp.pop %v382
    %v387 = vmul.f32 %v364, %v383
    %v388 = vmul.f32 %v366, %v384
    %v389 = vmul.f32 %v368, %v385
    %v390 = vmul.f32 %v370, %v386
    %v391 = vsel %vm340, %v387, 0.0
    %v392 = vsel %vm341, %v388, 0.0
    %v393 = vsel %vm340, %v389, 0.0
    %v394 = vsel %vm341, %v390, 0.0
    %395 = vst.msk [vmem:[#allocation10] sm:$0xff] %vm346, %v391
    %396 = vst.msk [vmem:[#allocation10 + $0x8] sm:$0xff] %vm346, %v392
    %397 = vst.msk [vmem:[#allocation10 + $0x10] sm:$0xff] %vm346, %v393
    %398 = vst.msk [vmem:[#allocation10 + $0x18] sm:$0xff] %vm346, %v394
    %v399 = vpack.c.bf16 %v78, %v77
    %v400 = vpack.c.bf16 %v80, %v79
    %v401 = vld [vmem:[#allocation7] sm:$0xf]
    %v402 = vld [vmem:[#allocation7 + $0x4] sm:$0xf]
    %v403 = vld [vmem:[#allocation7 + $0x8] sm:$0xf]
    %v404 = vld [vmem:[#allocation7 + $0xc] sm:$0xf]
    %v405 = vld [vmem:[#allocation7 + $0x10] sm:$0xf]
    %v406 = vld [vmem:[#allocation7 + $0x14] sm:$0xf]
    %v407 = vld [vmem:[#allocation7 + $0x18] sm:$0xf]
    %v408 = vld [vmem:[#allocation7 + $0x1c] sm:$0xf]
    %v409 = vld [vmem:[#allocation7 + $0x20] sm:$0xf]
    %v410 = vld [vmem:[#allocation7 + $0x24] sm:$0xf]
    %v411 = vld [vmem:[#allocation7 + $0x28] sm:$0xf]
    %v412 = vld [vmem:[#allocation7 + $0x2c] sm:$0xf]
    %v413 = vld [vmem:[#allocation7 + $0x30] sm:$0xf]
    %v414 = vld [vmem:[#allocation7 + $0x34] sm:$0xf]
    %v415 = vld [vmem:[#allocation7 + $0x38] sm:$0xf]
    %v416 = vld [vmem:[#allocation7 + $0x3c] sm:$0xf]
    %v433 = vunpack.c.l.b16 %v401
    %v434 = vunpack.c.l.b16 %v402
    %v435 = vunpack.c.l.b16 %v403
    %v436 = vunpack.c.l.b16 %v404
    %v437 = vunpack.c.l.b16 %v405
    %v438 = vunpack.c.l.b16 %v406
    %v439 = vunpack.c.l.b16 %v407
    %v440 = vunpack.c.l.b16 %v408
    %v441 = vunpack.c.l.b16 %v409
    %v442 = vunpack.c.l.b16 %v410
    %v443 = vunpack.c.l.b16 %v411
    %v444 = vunpack.c.l.b16 %v412
    %v445 = vunpack.c.l.b16 %v413
    %v446 = vunpack.c.l.b16 %v414
    %v447 = vunpack.c.l.b16 %v415
    %v448 = vunpack.c.l.b16 %v416
    %v449 = vpack.c.b16 %v434, %v433
    %v450 = vpack.c.b16 %v436, %v435
    %v451 = vpack.c.b16 %v438, %v437
    %v452 = vpack.c.b16 %v440, %v439
    %v453 = vpack.c.b16 %v442, %v441
    %v454 = vpack.c.b16 %v444, %v443
    %v455 = vpack.c.b16 %v446, %v445
    %v456 = vpack.c.b16 %v448, %v447
    %465 = vmatprep.subr.bf16.mxu0 0
    %466 = vmatpush1.bf16.msra.mxu0 %v456
    %467 = vmatprep.subr.bf16.mxu0 0
    %468 = vmatpush1.bf16.msra.mxu0 %v455
    %469 = vmatprep.subr.bf16.mxu0 0
    %470 = vmatpush1.bf16.msra.mxu0 %v454
    %471 = vmatprep.subr.bf16.mxu0 0
    %472 = vmatpush1.bf16.msra.mxu0 %v453
    %473 = vmatprep.subr.bf16.mxu0 0
    %474 = vmatpush1.bf16.msra.mxu0 %v452
    %475 = vmatprep.subr.bf16.mxu0 0
    %476 = vmatpush1.bf16.msra.mxu0 %v451
    %477 = vmatprep.subr.bf16.mxu0 0
    %478 = vmatpush1.bf16.msra.mxu0 %v450
    %479 = vmatprep.subr.bf16.mxu0 0
    %480 = vmatpush1.bf16.msra.mxu0 %v449
    %481 = vmatprep.subr.bf16.mxu0 0
    %482 = vmatpush2.bf16.msra.mxu0 0
    %483 = vmatprep.subr.bf16.mxu0 0
    %484 = vmatpush2.bf16.msra.mxu0 0
    %485 = vmatprep.subr.bf16.mxu0 0
    %486 = vmatpush2.bf16.msra.mxu0 0
    %487 = vmatprep.subr.bf16.mxu0 0
    %488 = vmatpush2.bf16.msra.mxu0 0
    %489 = vmatprep.subr.bf16.mxu0 0
    %490 = vmatpush2.bf16.msra.mxu0 0
    %491 = vmatprep.subr.bf16.mxu0 0
    %492 = vmatpush2.bf16.msra.mxu0 0
    %493 = vmatprep.subr.bf16.mxu0 0
    %494 = vmatpush2.bf16.msra.mxu0 0
    %495 = vmatprep.subr.bf16.mxu0 0
    %496 = vmatpush2.bf16.msra.mxu0 0
    %497 = vmatprep.mubr.bf16.mxu0 0
    %498 = vmatmul.mubr.bf16.gmra.mxu0 %v399
    %v499 = vpop.f32.mrf.mxu0
    %v500 = vadd.f32 0.0, %v499
    %v501 = vpop.f32.mrf.mxu0
    %v502 = vpop.f32.mrf.mxu0
    %v503 = vadd.f32 0.0, %v502
    %v504 = vpop.f32.mrf.mxu0
    %505 = vmatprep.mubr.bf16.mxu0 0
    %506 = vmatmul.mubr.bf16.gmra.mxu0 %v400
    %v507 = vpop.f32.mrf.mxu0
    %v508 = vadd.f32 0.0, %v507
    %v509 = vpop.f32.mrf.mxu0
    %v510 = vpop.f32.mrf.mxu0
    %v511 = vadd.f32 0.0, %v510
    %v512 = vpop.f32.mrf.mxu0
    %513 = vdwg.mxu0
    %v515 = vsel %vm346, %v391, 0
    %v518 = vsel %vm346, %v392, 0
    %520 = vmatprep.subr.mxu0 0.0
    %521 = vmatpush1.msra.mxu0 0.0
    %522 = vmatprep.subr.mxu0 0.0
    %523 = vmatpush1.msra.mxu0 0.0
    %524 = vmatprep.subr.mxu0 0.0
    %525 = vmatpush1.msra.mxu0 0.0
    %526 = vmatprep.subr.mxu0 0.0
    %527 = vmatpush1.msra.mxu0 0.0
    %528 = vmatprep.subr.mxu0 0.0
    %529 = vmatpush1.msra.mxu0 0.0
    %530 = vmatprep.subr.mxu0 0.0
    %531 = vmatpush1.msra.mxu0 0.0
    %532 = vmatprep.subr.mxu0 0.0
    %533 = vmatpush1.msra.mxu0 0.0
    %534 = vmatprep.subr.mxu0 0.0
    %535 = vmatpush1.msra.mxu0 0.0
    %536 = vmatprep.subr.mxu0 0.0
    %537 = vmatpush1.msra.mxu0 0.0
    %538 = vmatprep.subr.mxu0 0.0
    %539 = vmatpush1.msra.mxu0 0.0
    %540 = vmatprep.subr.mxu0 0.0
    %541 = vmatpush1.msra.mxu0 0.0
    %542 = vmatprep.subr.mxu0 0.0
    %543 = vmatpush1.msra.mxu0 0.0
    %544 = vmatprep.subr.mxu0 0.0
    %545 = vmatpush1.msra.mxu0 0.0
    %546 = vmatprep.subr.mxu0 0.0
    %547 = vmatpush1.msra.mxu0 0.0
    %548 = vmatprep.subr.mxu0 0.0
    %549 = vmatpush1.msra.mxu0 %v503
    %550 = vmatprep.subr.mxu0 0.0
    %551 = vmatpush1.msra.mxu0 %v500
    %552 = vmatprep.subr.mxu0 0.0
    %553 = vmatpush2.msra.mxu0 0.0
    %554 = vmatprep.subr.mxu0 0.0
    %555 = vmatpush2.msra.mxu0 0.0
    %556 = vmatprep.subr.mxu0 0.0
    %557 = vmatpush2.msra.mxu0 0.0
    %558 = vmatprep.subr.mxu0 0.0
    %559 = vmatpush2.msra.mxu0 0.0
    %560 = vmatprep.subr.mxu0 0.0
    %561 = vmatpush2.msra.mxu0 0.0
    %562 = vmatprep.subr.mxu0 0.0
    %563 = vmatpush2.msra.mxu0 0.0
    %564 = vmatprep.subr.mxu0 0.0
    %565 = vmatpush2.msra.mxu0 0.0
    %566 = vmatprep.subr.mxu0 0.0
    %567 = vmatpush2.msra.mxu0 0.0
    %568 = vmatprep.subr.mxu0 0.0
    %569 = vmatpush2.msra.mxu0 0.0
    %570 = vmatprep.subr.mxu0 0.0
    %571 = vmatpush2.msra.mxu0 0.0
    %572 = vmatprep.subr.mxu0 0.0
    %573 = vmatpush2.msra.mxu0 0.0
    %574 = vmatprep.subr.mxu0 0.0
    %575 = vmatpush2.msra.mxu0 0.0
    %576 = vmatprep.subr.mxu0 0.0
    %577 = vmatpush2.msra.mxu0 0.0
    %578 = vmatprep.subr.mxu0 0.0
    %579 = vmatpush2.msra.mxu0 0.0
    %580 = vmatprep.subr.mxu0 0.0
    %581 = vmatpush2.msra.mxu0 0.0
    %582 = vmatprep.subr.mxu0 0.0
    %583 = vmatpush2.msra.mxu0 0.0
    %584 = vmatprep.mubr.f32.mxu0 0.0
    %585 = vmatmul.mubr.f32.gmra.mxu0 %v515
    %v586 = vpop.f32.mrf.mxu0
    %v587 = vadd.f32 0.0, %v586
    %v588 = vpop.f32.mrf.mxu0
    %589 = vmatprep.mubr.f32.mxu0 0.0
    %590 = vmatmul.mubr.f32.gmra.mxu0 %v518
    %v591 = vpop.f32.mrf.mxu0
    %v592 = vadd.f32 0.0, %v591
    %v593 = vpop.f32.mrf.mxu0
    %594 = vdwg.mxu0
    %v596 = vsel %vm346, %v393, 0
    %v599 = vsel %vm346, %v394, 0
    %601 = vmatprep.subr.mxu0 0.0
    %602 = vmatpush1.msra.mxu0 0.0
    %603 = vmatprep.subr.mxu0 0.0
    %604 = vmatpush1.msra.mxu0 0.0
    %605 = vmatprep.subr.mxu0 0.0
    %606 = vmatpush1.msra.mxu0 0.0
    %607 = vmatprep.subr.mxu0 0.0
    %608 = vmatpush1.msra.mxu0 0.0
    %609 = vmatprep.subr.mxu0 0.0
    %610 = vmatpush1.msra.mxu0 0.0
    %611 = vmatprep.subr.mxu0 0.0
    %612 = vmatpush1.msra.mxu0 0.0
    %613 = vmatprep.subr.mxu0 0.0
    %614 = vmatpush1.msra.mxu0 0.0
    %615 = vmatprep.subr.mxu0 0.0
    %616 = vmatpush1.msra.mxu0 0.0
    %617 = vmatprep.subr.mxu0 0.0
    %618 = vmatpush1.msra.mxu0 0.0
    %619 = vmatprep.subr.mxu0 0.0
    %620 = vmatpush1.msra.mxu0 0.0
    %621 = vmatprep.subr.mxu0 0.0
    %622 = vmatpush1.msra.mxu0 0.0
    %623 = vmatprep.subr.mxu0 0.0
    %624 = vmatpush1.msra.mxu0 0.0
    %625 = vmatprep.subr.mxu0 0.0
    %626 = vmatpush1.msra.mxu0 0.0
    %627 = vmatprep.subr.mxu0 0.0
    %628 = vmatpush1.msra.mxu0 0.0
    %629 = vmatprep.subr.mxu0 0.0
    %630 = vmatpush1.msra.mxu0 %v511
    %631 = vmatprep.subr.mxu0 0.0
    %632 = vmatpush1.msra.mxu0 %v508
    %633 = vmatprep.subr.mxu0 0.0
    %634 = vmatpush2.msra.mxu0 0.0
    %635 = vmatprep.subr.mxu0 0.0
    %636 = vmatpush2.msra.mxu0 0.0
    %637 = vmatprep.subr.mxu0 0.0
    %638 = vmatpush2.msra.mxu0 0.0
    %639 = vmatprep.subr.mxu0 0.0
    %640 = vmatpush2.msra.mxu0 0.0
    %641 = vmatprep.subr.mxu0 0.0
    %642 = vmatpush2.msra.mxu0 0.0
    %643 = vmatprep.subr.mxu0 0.0
    %644 = vmatpush2.msra.mxu0 0.0
    %645 = vmatprep.subr.mxu0 0.0
    %646 = vmatpush2.msra.mxu0 0.0
    %647 = vmatprep.subr.mxu0 0.0
    %648 = vmatpush2.msra.mxu0 0.0
    %649 = vmatprep.subr.mxu0 0.0
    %650 = vmatpush2.msra.mxu0 0.0
    %651 = vmatprep.subr.mxu0 0.0
    %652 = vmatpush2.msra.mxu0 0.0
    %653 = vmatprep.subr.mxu0 0.0
    %654 = vmatpush2.msra.mxu0 0.0
    %655 = vmatprep.subr.mxu0 0.0
    %656 = vmatpush2.msra.mxu0 0.0
    %657 = vmatprep.subr.mxu0 0.0
    %658 = vmatpush2.msra.mxu0 0.0
    %659 = vmatprep.subr.mxu0 0.0
    %660 = vmatpush2.msra.mxu0 0.0
    %661 = vmatprep.subr.mxu0 0.0
    %662 = vmatpush2.msra.mxu0 0.0
    %663 = vmatprep.subr.mxu0 0.0
    %664 = vmatpush2.msra.mxu0 0.0
    %665 = vmatprep.mubr.f32.mxu0 0.0
    %666 = vmatmul.mubr.f32.gmra.mxu0 %v596
    %v667 = vpop.f32.mrf.mxu0
    %v668 = vadd.f32 0.0, %v667
    %v669 = vpop.f32.mrf.mxu0
    %670 = vmatprep.mubr.f32.mxu0 0.0
    %671 = vmatmul.mubr.f32.gmra.mxu0 %v599
    %v672 = vpop.f32.mrf.mxu0
    %v673 = vadd.f32 0.0, %v672
    %v674 = vpop.f32.mrf.mxu0
    %675 = vdwg.mxu0
    %vm676 = vcmp.ge.f32.partialorder %v587, 0.0
    %vm677 = vcmp.ge.f32.partialorder %v592, 0.0
    %vm678 = vcmp.ge.f32.partialorder %v668, 0.0
    %vm679 = vcmp.ge.f32.partialorder %v673, 0.0
    %v680 = vmul.f32 %v587, 0.1
    %v681 = vmul.f32 %v592, 0.1
    %v682 = vmul.f32 %v668, 0.1
    %v683 = vmul.f32 %v673, 0.1
    %v684 = vsel %vm676, %v587, %v680
    %v685 = vsel %vm677, %v592, %v681
    %v686 = vsel %vm678, %v668, %v682
    %v687 = vsel %vm679, %v673, %v683
    %v688 = vpack.c.bf16 %v685, %v684
    %v689 = vpack.c.bf16 %v687, %v686
    %v690 = vld [vmem:[#allocation8] sm:$0xf]
    %v691 = vld [vmem:[#allocation8 + $0x4] sm:$0xf]
    %v692 = vld [vmem:[#allocation8 + $0x8] sm:$0xf]
    %v693 = vld [vmem:[#allocation8 + $0xc] sm:$0xf]
    %v694 = vld [vmem:[#allocation8 + $0x10] sm:$0xf]
    %v695 = vld [vmem:[#allocation8 + $0x14] sm:$0xf]
    %v696 = vld [vmem:[#allocation8 + $0x18] sm:$0xf]
    %v697 = vld [vmem:[#allocation8 + $0x1c] sm:$0xf]
    %v698 = vld [vmem:[#allocation8 + $0x20] sm:$0xf]
    %v699 = vld [vmem:[#allocation8 + $0x24] sm:$0xf]
    %v700 = vld [vmem:[#allocation8 + $0x28] sm:$0xf]
    %v701 = vld [vmem:[#allocation8 + $0x2c] sm:$0xf]
    %v702 = vld [vmem:[#allocation8 + $0x30] sm:$0xf]
    %v703 = vld [vmem:[#allocation8 + $0x34] sm:$0xf]
    %v704 = vld [vmem:[#allocation8 + $0x38] sm:$0xf]
    %v705 = vld [vmem:[#allocation8 + $0x3c] sm:$0xf]
    %v722 = vunpack.c.l.b16 %v690
    %v723 = vunpack.c.l.b16 %v691
    %v724 = vunpack.c.l.b16 %v692
    %v725 = vunpack.c.l.b16 %v693
    %v726 = vunpack.c.l.b16 %v694
    %v727 = vunpack.c.l.b16 %v695
    %v728 = vunpack.c.l.b16 %v696
    %v729 = vunpack.c.l.b16 %v697
    %v730 = vunpack.c.l.b16 %v698
    %v731 = vunpack.c.l.b16 %v699
    %v732 = vunpack.c.l.b16 %v700
    %v733 = vunpack.c.l.b16 %v701
    %v734 = vunpack.c.l.b16 %v702
    %v735 = vunpack.c.l.b16 %v703
    %v736 = vunpack.c.l.b16 %v704
    %v737 = vunpack.c.l.b16 %v705
    %v738 = vpack.c.b16 %v723, %v722
    %v739 = vpack.c.b16 %v725, %v724
    %v740 = vpack.c.b16 %v727, %v726
    %v741 = vpack.c.b16 %v729, %v728
    %v742 = vpack.c.b16 %v731, %v730
    %v743 = vpack.c.b16 %v733, %v732
    %v744 = vpack.c.b16 %v735, %v734
    %v745 = vpack.c.b16 %v737, %v736
    %754 = vmatprep.subr.bf16.mxu0 0
    %755 = vmatpush1.bf16.msra.mxu0 %v745
    %756 = vmatprep.subr.bf16.mxu0 0
    %757 = vmatpush1.bf16.msra.mxu0 %v744
    %758 = vmatprep.subr.bf16.mxu0 0
    %759 = vmatpush1.bf16.msra.mxu0 %v743
    %760 = vmatprep.subr.bf16.mxu0 0
    %761 = vmatpush1.bf16.msra.mxu0 %v742
    %762 = vmatprep.subr.bf16.mxu0 0
    %763 = vmatpush1.bf16.msra.mxu0 %v741
    %764 = vmatprep.subr.bf16.mxu0 0
    %765 = vmatpush1.bf16.msra.mxu0 %v740
    %766 = vmatprep.subr.bf16.mxu0 0
    %767 = vmatpush1.bf16.msra.mxu0 %v739
    %768 = vmatprep.subr.bf16.mxu0 0
    %769 = vmatpush1.bf16.msra.mxu0 %v738
    %770 = vmatprep.subr.bf16.mxu0 0
    %771 = vmatpush2.bf16.msra.mxu0 0
    %772 = vmatprep.subr.bf16.mxu0 0
    %773 = vmatpush2.bf16.msra.mxu0 0
    %774 = vmatprep.subr.bf16.mxu0 0
    %775 = vmatpush2.bf16.msra.mxu0 0
    %776 = vmatprep.subr.bf16.mxu0 0
    %777 = vmatpush2.bf16.msra.mxu0 0
    %778 = vmatprep.subr.bf16.mxu0 0
    %779 = vmatpush2.bf16.msra.mxu0 0
    %780 = vmatprep.subr.bf16.mxu0 0
    %781 = vmatpush2.bf16.msra.mxu0 0
    %782 = vmatprep.subr.bf16.mxu0 0
    %783 = vmatpush2.bf16.msra.mxu0 0
    %784 = vmatprep.subr.bf16.mxu0 0
    %785 = vmatpush2.bf16.msra.mxu0 0
    %786 = vmatprep.mubr.bf16.mxu0 0
    %787 = vmatmul.mubr.bf16.gmra.mxu0 %v688
    %v788 = vpop.f32.mrf.mxu0
    %v789 = vadd.f32 0.0, %v788
    %v790 = vpop.f32.mrf.mxu0
    %v791 = vpop.f32.mrf.mxu0
    %v792 = vadd.f32 0.0, %v791
    %v793 = vpop.f32.mrf.mxu0
    %794 = vmatprep.mubr.bf16.mxu0 0
    %795 = vmatmul.mubr.bf16.gmra.mxu0 %v689
    %v796 = vpop.f32.mrf.mxu0
    %v797 = vadd.f32 0.0, %v796
    %v798 = vpop.f32.mrf.mxu0
    %v799 = vpop.f32.mrf.mxu0
    %v800 = vadd.f32 0.0, %v799
    %v801 = vpop.f32.mrf.mxu0
    %802 = vdwg.mxu0
    %803 = vmatprep.subr.mxu0 0.0
    %804 = vmatpush1.msra.mxu0 0.0
    %805 = vmatprep.subr.mxu0 0.0
    %806 = vmatpush1.msra.mxu0 0.0
    %807 = vmatprep.subr.mxu0 0.0
    %808 = vmatpush1.msra.mxu0 0.0
    %809 = vmatprep.subr.mxu0 0.0
    %810 = vmatpush1.msra.mxu0 0.0
    %811 = vmatprep.subr.mxu0 0.0
    %812 = vmatpush1.msra.mxu0 0.0
    %813 = vmatprep.subr.mxu0 0.0
    %814 = vmatpush1.msra.mxu0 0.0
    %815 = vmatprep.subr.mxu0 0.0
    %816 = vmatpush1.msra.mxu0 0.0
    %817 = vmatprep.subr.mxu0 0.0
    %818 = vmatpush1.msra.mxu0 0.0
    %819 = vmatprep.subr.mxu0 0.0
    %820 = vmatpush1.msra.mxu0 0.0
    %821 = vmatprep.subr.mxu0 0.0
    %822 = vmatpush1.msra.mxu0 0.0
    %823 = vmatprep.subr.mxu0 0.0
    %824 = vmatpush1.msra.mxu0 0.0
    %825 = vmatprep.subr.mxu0 0.0
    %826 = vmatpush1.msra.mxu0 0.0
    %827 = vmatprep.subr.mxu0 0.0
    %828 = vmatpush1.msra.mxu0 0.0
    %829 = vmatprep.subr.mxu0 0.0
    %830 = vmatpush1.msra.mxu0 0.0
    %831 = vmatprep.subr.mxu0 0.0
    %832 = vmatpush1.msra.mxu0 %v792
    %833 = vmatprep.subr.mxu0 0.0
    %834 = vmatpush1.msra.mxu0 %v789
    %835 = vmatprep.subr.mxu0 0.0
    %836 = vmatpush2.msra.mxu0 0.0
    %837 = vmatprep.subr.mxu0 0.0
    %838 = vmatpush2.msra.mxu0 0.0
    %839 = vmatprep.subr.mxu0 0.0
    %840 = vmatpush2.msra.mxu0 0.0
    %841 = vmatprep.subr.mxu0 0.0
    %842 = vmatpush2.msra.mxu0 0.0
    %843 = vmatprep.subr.mxu0 0.0
    %844 = vmatpush2.msra.mxu0 0.0
    %845 = vmatprep.subr.mxu0 0.0
    %846 = vmatpush2.msra.mxu0 0.0
    %847 = vmatprep.subr.mxu0 0.0
    %848 = vmatpush2.msra.mxu0 0.0
    %849 = vmatprep.subr.mxu0 0.0
    %850 = vmatpush2.msra.mxu0 0.0
    %851 = vmatprep.subr.mxu0 0.0
    %852 = vmatpush2.msra.mxu0 0.0
    %853 = vmatprep.subr.mxu0 0.0
    %854 = vmatpush2.msra.mxu0 0.0
    %855 = vmatprep.subr.mxu0 0.0
    %856 = vmatpush2.msra.mxu0 0.0
    %857 = vmatprep.subr.mxu0 0.0
    %858 = vmatpush2.msra.mxu0 0.0
    %859 = vmatprep.subr.mxu0 0.0
    %860 = vmatpush2.msra.mxu0 0.0
    %861 = vmatprep.subr.mxu0 0.0
    %862 = vmatpush2.msra.mxu0 0.0
    %863 = vmatprep.subr.mxu0 0.0
    %864 = vmatpush2.msra.mxu0 0.0
    %865 = vmatprep.subr.mxu0 0.0
    %866 = vmatpush2.msra.mxu0 0.0
    %867 = vmatprep.mubr.f32.mxu0 0.0
    %868 = vmatmul.mubr.f32.gmra.mxu0 %v515
    %v869 = vpop.f32.mrf.mxu0
    %v870 = vadd.f32 0.0, %v869
    %v871 = vpop.f32.mrf.mxu0
    %872 = vmatprep.mubr.f32.mxu0 0.0
    %873 = vmatmul.mubr.f32.gmra.mxu0 %v518
    %v874 = vpop.f32.mrf.mxu0
    %v875 = vpop.f32.mrf.mxu0
    %876 = vdwg.mxu0
    %877 = vmatprep.subr.mxu0 0.0
    %878 = vmatpush1.msra.mxu0 0.0
    %879 = vmatprep.subr.mxu0 0.0
    %880 = vmatpush1.msra.mxu0 0.0
    %881 = vmatprep.subr.mxu0 0.0
    %882 = vmatpush1.msra.mxu0 0.0
    %883 = vmatprep.subr.mxu0 0.0
    %884 = vmatpush1.msra.mxu0 0.0
    %885 = vmatprep.subr.mxu0 0.0
    %886 = vmatpush1.msra.mxu0 0.0
    %887 = vmatprep.subr.mxu0 0.0
    %888 = vmatpush1.msra.mxu0 0.0
    %889 = vmatprep.subr.mxu0 0.0
    %890 = vmatpush1.msra.mxu0 0.0
    %891 = vmatprep.subr.mxu0 0.0
    %892 = vmatpush1.msra.mxu0 0.0
    %893 = vmatprep.subr.mxu0 0.0
    %894 = vmatpush1.msra.mxu0 0.0
    %895 = vmatprep.subr.mxu0 0.0
    %896 = vmatpush1.msra.mxu0 0.0
    %897 = vmatprep.subr.mxu0 0.0
    %898 = vmatpush1.msra.mxu0 0.0
    %899 = vmatprep.subr.mxu0 0.0
    %900 = vmatpush1.msra.mxu0 0.0
    %901 = vmatprep.subr.mxu0 0.0
    %902 = vmatpush1.msra.mxu0 0.0
    %903 = vmatprep.subr.mxu0 0.0
    %904 = vmatpush1.msra.mxu0 0.0
    %905 = vmatprep.subr.mxu0 0.0
    %906 = vmatpush1.msra.mxu0 %v800
    %907 = vmatprep.subr.mxu0 0.0
    %908 = vmatpush1.msra.mxu0 %v797
    %909 = vmatprep.subr.mxu0 0.0
    %910 = vmatpush2.msra.mxu0 0.0
    %911 = vmatprep.subr.mxu0 0.0
    %912 = vmatpush2.msra.mxu0 0.0
    %913 = vmatprep.subr.mxu0 0.0
    %914 = vmatpush2.msra.mxu0 0.0
    %915 = vmatprep.subr.mxu0 0.0
    %916 = vmatpush2.msra.mxu0 0.0
    %917 = vmatprep.subr.mxu0 0.0
    %918 = vmatpush2.msra.mxu0 0.0
    %919 = vmatprep.subr.mxu0 0.0
    %920 = vmatpush2.msra.mxu0 0.0
    %921 = vmatprep.subr.mxu0 0.0
    %922 = vmatpush2.msra.mxu0 0.0
    %923 = vmatprep.subr.mxu0 0.0
    %924 = vmatpush2.msra.mxu0 0.0
    %925 = vmatprep.subr.mxu0 0.0
    %926 = vmatpush2.msra.mxu0 0.0
    %927 = vmatprep.subr.mxu0 0.0
    %928 = vmatpush2.msra.mxu0 0.0
    %929 = vmatprep.subr.mxu0 0.0
    %930 = vmatpush2.msra.mxu0 0.0
    %931 = vmatprep.subr.mxu0 0.0
    %932 = vmatpush2.msra.mxu0 0.0
    %933 = vmatprep.subr.mxu0 0.0
    %934 = vmatpush2.msra.mxu0 0.0
    %935 = vmatprep.subr.mxu0 0.0
    %936 = vmatpush2.msra.mxu0 0.0
    %937 = vmatprep.subr.mxu0 0.0
    %938 = vmatpush2.msra.mxu0 0.0
    %939 = vmatprep.subr.mxu0 0.0
    %940 = vmatpush2.msra.mxu0 0.0
    %941 = vmatprep.mubr.f32.mxu0 0.0
    %942 = vmatmul.mubr.f32.gmra.mxu0 %v596
    %v943 = vpop.f32.mrf.mxu0
    %v944 = vadd.f32 0.0, %v943
    %v945 = vpop.f32.mrf.mxu0
    %946 = vmatprep.mubr.f32.mxu0 0.0
    %947 = vmatmul.mubr.f32.gmra.mxu0 %v599
    %v948 = vpop.f32.mrf.mxu0
    %v949 = vpop.f32.mrf.mxu0
    %950 = vdwg.mxu0
    %vm951 = vcmp.ge.f32.partialorder %v870, 0.0
    %vm952 = vcmp.ge.f32.partialorder %v944, 0.0
    %v953 = vmul.f32 %v870, 0.1
    %v954 = vmul.f32 %v944, 0.1
    %v955 = vsel %vm951, %v870, %v953
    %v956 = vsel %vm952, %v944, %v954
    %957 = vst [vmem:[#allocation11] sm:$0xff] %v955
    %958 = vst [vmem:[#allocation11 + $0x8] sm:$0xff] %v956
    // Predicated region
    $region34: #{tpu_custom_call.1} parent=1 // pred_check
      _
    $region35: #{tpu_custom_call.1} parent=1 // pred_check_branch
      %960 = sbr.rel (0) target = $region37
    $region36: #{tpu_custom_call.1} parent=1 // pred_region
      %s962 = ssub.s32 512, 512
      %963 = vsyncadd [#allocation4], %s962
      %s964 = sshll.u32 [#allocation10], 4
      %s965 = int_to_ptr.vmem [resolvable:$true] %s964
      %970 = dma.vmem_to_hbm [thread:$0]  %s965, 512, %s4, [#allocation4], 128, 128, 8
    $region37: #{tpu_custom_call.1} parent=1 // pred_fallthru
      _
    // Predicated region
    $region38: #{tpu_custom_call.1} parent=1 // pred_check
      _
    $region39: #{tpu_custom_call.1} parent=1 // pred_check_branch
      %972 = sbr.rel (0) target = $region41
    $region40: #{tpu_custom_call.1} parent=1 // pred_region
      %s974 = ssub.s32 256, 256
      %975 = vsyncadd [#allocation12], %s974
      %s976 = sshll.u32 [#allocation11], 4
      %s977 = int_to_ptr.vmem [resolvable:$true] %s976
      %982 = dma.vmem_to_hbm [thread:$0]  %s977, 256, %s5, [#allocation12], 128, 128, 8
    $region41: #{tpu_custom_call.1} parent=1 // pred_fallthru
      _
    // Predicated region
    $region42: #{tpu_custom_call.1} parent=1 // pred_check
      _
    $region43: #{tpu_custom_call.1} parent=1 // pred_check_branch
      %984 = sbr.rel (0) target = $region45
    $region44: #{tpu_custom_call.1} parent=1 // pred_region
      %985 = dma.done [#allocation4], 512
    $region45: #{tpu_custom_call.1} parent=1 // pred_fallthru
      _
    // Predicated region
    $region46: #{tpu_custom_call.1} parent=1 // pred_check
      _
    $region47: #{tpu_custom_call.1} parent=1 // pred_check_branch
      %987 = sbr.rel (0) target = $region49
    $region48: #{tpu_custom_call.1} parent=1 // pred_region
      %988 = dma.done [#allocation12], 256
    $region49: #{tpu_custom_call.1} parent=1 // pred_fallthru
      _
    %989 = vsyncpa [#allocation3], 1
    %990 = vsyncpa [#allocation6], 1
    %991 = vsyncpa [#allocation9], 1
    %992 = vsyncpa [#allocation4], 1
    %993 = vsyncpa [#allocation12], 1

</llo_original>
